<compile_context>
chip_gen: v7x
topology: tpu7x:2x2x1
jax: 0.10.0
libtpu: 0.0.40
codegen_flags: <defaults>
</compile_context>

<pallas_src>
import functools

import jax
import jax.numpy as jnp
from jax import lax
from jax.experimental import pallas as pl
from jax.experimental.pallas import tpu as pltpu

_LANE = 128
# ~512K elements per block: 2 MiB f32 / 1 MiB bf16 per operand.
_TARGET_BLOCK_ELEMS = 1 << 19


# ----------------------------------------------------------------------------
# Layout helpers: flatten to a lane-dense (rows, cols) slab without padding.
# ----------------------------------------------------------------------------
def _choose_layout(n: int):
    """Pick (rows, cols, pad) for a flat buffer of n elements.

    Prefers the widest cols (multiple of 128) that divides n with at least 8
    rows, so stores are wide and unmasked and no wrapper-side padding copy
    (an extra full HBM pass) is needed.
    """
    fallback = None
    for cols in (8192, 4096, 2048, 1024, 512, 256, 128):
        if n % cols == 0:
            rows = n // cols
            if fallback is None:
                fallback = (rows, cols)
            if rows >= 8:
                return rows, cols, 0
    if fallback is not None:
        # Small tensor: block == full array extent, which Pallas accepts even
        # when it is not (8,128)-divisible.
        return fallback[0], fallback[1], 0
    # Ragged tail (n not a multiple of 128) -- rare for NN activations.  Pad
    # to the next multiple of cols; costs one extra HBM pass over the inputs,
    # so only taken when unavoidable.
    cols = 1024 if n >= 1024 else _LANE
    padded = -(-n // cols) * cols
    return padded // cols, cols, padded - n


def _row_tile(rows: int, cols: int, itemsize: int) -> int:
    """Rows per block, sized for ~_TARGET_BLOCK_ELEMS elements per operand."""
    rt = max(1, _TARGET_BLOCK_ELEMS // cols)
    if rt >= rows:
        return rows  # single full-extent block along sublanes
    # Keep the sublane extent a multiple of the packed-sublane granule
    # (8 for f32, 16 for bf16, 32 for int8) to avoid packed-layout padding.
    mult = 8 * max(1, 4 // itemsize)
    rt = max(mult, (rt // mult) * mult)
    rt = min(rt, rows)
    if rows % rt != 0:
        # Snap to the largest divisor of `rows` that is a multiple of `mult`
        # and within 2x of the target, so every block (incl. the last) is full
        # and stores stay unmasked.  Fall back to masked last block otherwise.
        best = 0
        d = (rt // mult) * mult
        while d >= mult and d * 2 >= rt:
            if rows % d == 0:
                best = d
                break
            d -= mult
        if best:
            rt = best
    return rt


def _to_slab(a: jax.Array, rows: int, cols: int, pad: int) -> jax.Array:
    flat = a.reshape(-1)
    if pad:
        flat = jnp.pad(flat, (0, pad))
    return flat.reshape(rows, cols)


def _from_slab(slab: jax.Array, n: int, pad: int, shape) -> jax.Array:
    if pad:
        return slab.reshape(-1)[:n].reshape(shape)
    return slab.reshape(shape)


# ----------------------------------------------------------------------------
# Kernels
# ----------------------------------------------------------------------------
def _fused_kernel(x_ref, out_ref, *, scale, res_fn):
    # out = x + scale * res_fn(x); the residual branch is fused so x is read
    # from HBM exactly once.
    x = x_ref[...]
    res = res_fn(x)
    if scale == 1.0:
        out_ref[...] = (x + res.astype(x.dtype)).astype(out_ref.dtype)
    else:
        out = x.astype(jnp.float32) + jnp.float32(scale) * res.astype(jnp.float32)
        out_ref[...] = out.astype(out_ref.dtype)


def _combine_kernel(id_ref, res_ref, out_ref, *, scale):
    # out = identity + scale * res (general, un-fused path).
    if scale == 1.0:
        out_ref[...] = (id_ref[...] + res_ref[...]).astype(out_ref.dtype)
    else:
        out = (id_ref[...].astype(jnp.float32)
               + jnp.float32(scale) * res_ref[...].astype(jnp.float32))
        out_ref[...] = out.astype(out_ref.dtype)


def _elementwise_call(kernel, operands, out_dtype, rows, cols, itemsize):
    rt = _row_tile(rows, cols, itemsize)
    grid = (pl.cdiv(rows, rt),)  # Pallas masks a ragged last block if any.
    spec = pl.BlockSpec((rt, cols), lambda i: (i, 0))
    return pl.pallas_call(
        kernel,
        out_shape=jax.ShapeDtypeStruct((rows, cols), out_dtype),
        grid=grid,
        in_specs=[spec] * len(operands),
        out_specs=spec,
        compiler_params=pltpu.CompilerParams(
            dimension_semantics=("parallel",)),  # lets v7x shard over 2 TCs
    )(*operands)


# ----------------------------------------------------------------------------
# Public wrappers
# ----------------------------------------------------------------------------
def residual_combine(identity: jax.Array, res: jax.Array, scale: float) -> jax.Array:
    """identity + scale * res, computed in a Pallas TPU kernel."""
    assert identity.shape == res.shape and identity.dtype == res.dtype
    n = identity.size
    rows, cols, pad = _choose_layout(n)
    itemsize = jnp.dtype(identity.dtype).itemsize
    id2 = _to_slab(identity, rows, cols, pad)
    res2 = _to_slab(res, rows, cols, pad)
    kernel = functools.partial(_combine_kernel, scale=float(scale))
    out2 = _elementwise_call(kernel, (id2, res2), identity.dtype, rows, cols, itemsize)
    return _from_slab(out2, n, pad, identity.shape)


def residual_fused(x: jax.Array, res_fn, scale: float) -> jax.Array:
    """x + scale * res_fn(x) with the elementwise res_fn fused inside the kernel."""
    n = x.size
    rows, cols, pad = _choose_layout(n)
    itemsize = jnp.dtype(x.dtype).itemsize
    x2 = _to_slab(x, rows, cols, pad)
    kernel = functools.partial(_fused_kernel, scale=float(scale), res_fn=res_fn)
    out2 = _elementwise_call(kernel, (x2,), x.dtype, rows, cols, itemsize)
    return _from_slab(out2, n, pad, x.shape)


# ----------------------------------------------------------------------------
# Module port
# ----------------------------------------------------------------------------
class ResidualBasePallas:
    """JAX/Pallas port of ptsr.model.common.ResidualBase.

    ResidualBase declares no parameters; `_forward_res` is abstract (raises
    NotImplementedError), so it is injected here as `forward_res_fn`.  If the
    residual branch is elementwise, set `res_is_elementwise=True` and it is
    fused into the combine kernel (x read once from HBM).
    """

    def __init__(self, stochastic_depth: bool = False, prob: float = 1.0,
                 multFlag: bool = True, forward_res_fn=None,
                 res_is_elementwise: bool = False):
        self.sd = stochastic_depth
        self.prob = prob
        self.multFlag = multFlag
        # TODO(synk): `_forward_res` raises NotImplementedError in the base
        # class; a subclass-supplied callable stands in here.
        self._forward_res = forward_res_fn
        self._fuse = res_is_elementwise
        self.training = False

    def _apply_residual(self, x: jax.Array, scale: float) -> jax.Array:
        if self._fuse:
            return residual_fused(x, self._forward_res, scale)
        res = self._forward_res(x)
        return residual_combine(x, res, scale)

    def __call__(self, x: jax.Array, rng: jax.Array | None = None) -> jax.Array:
        # identity = x.clone() -- JAX arrays are immutable; no copy needed.
        if self.training:
            return self._forward_train(x, rng)
        return self._forward_test(x)

    def _forward_train(self, x, rng):
        if not self.sd:
            return self._apply_residual(x, 1.0)
        if rng is None:
            rng = jax.random.PRNGKey(0)
        gate = jax.random.uniform(rng, ()) < self.prob
        # TODO(synk): the requires_grad toggling on parameters has no JAX
        # equivalent (gradient flow is handled via jax.grad / stop_gradient).
        # lax.cond skips the residual branch (and its kernel) entirely when
        # the gate is false, matching the PyTorch branch-skip semantics/cost.
        return lax.cond(gate,
                        lambda t: self._apply_residual(t, 1.0),
                        lambda t: t,
                        x)

    def _forward_test(self, x):
        scale = self.prob if (self.sd and self.multFlag) else 1.0
        return self._apply_residual(x, scale)


if __name__ == "__main__":
    key = jax.random.PRNGKey(0)
    x = jax.random.normal(key, (2, 4, 16, 16), dtype=jnp.float32)  # NCHW

    # Deterministic elementwise stand-in for the abstract residual branch.
    forward_res_fn = lambda t: 0.1 * t

    # 1) Eval-mode stochastic-depth path (fused): out = identity + prob * res
    prob = 0.8
    m1 = ResidualBasePallas(stochastic_depth=True, prob=prob, multFlag=True,
                            forward_res_fn=forward_res_fn,
                            res_is_elementwise=True)
    m1.training = False
    out1 = jax.block_until_ready(m1(x))
    exp1 = x + prob * forward_res_fn(x)
    assert out1.shape == x.shape and out1.dtype == x.dtype
    assert jnp.allclose(out1, exp1, atol=1e-6, rtol=1e-6)

    # 2) Eval-mode, non-sd, general (un-fused) combine path: out = identity + res
    m2 = ResidualBasePallas(stochastic_depth=False,
                            forward_res_fn=forward_res_fn)
    m2.training = False
    out2 = jax.block_until_ready(m2(x))
    assert jnp.allclose(out2, x + forward_res_fn(x), atol=1e-6, rtol=1e-6)

    # 3) Training stochastic-depth path: lax.cond-gated residual branch.
    m3 = ResidualBasePallas(stochastic_depth=True, prob=prob, multFlag=True,
                            forward_res_fn=forward_res_fn,
                            res_is_elementwise=True)
    m3.training = True
    rng = jax.random.PRNGKey(1)
    out3 = jax.block_until_ready(m3(x, rng))
    gate = jax.random.uniform(rng, ()) < prob
    exp3 = jnp.where(gate, x + forward_res_fn(x), x)
    assert jnp.allclose(out3, exp3, atol=1e-6, rtol=1e-6)

    # 4) bf16 sanity check of the scaled path (f32 accumulate, cast on store).
    xb = x.astype(jnp.bfloat16)
    out4 = jax.block_until_ready(m1(xb))
    exp4 = (xb.astype(jnp.float32)
            + prob * forward_res_fn(xb).astype(jnp.float32)).astype(jnp.bfloat16)
    assert out4.dtype == jnp.bfloat16
    assert jnp.allclose(out4.astype(jnp.float32), exp4.astype(jnp.float32),
                        atol=1e-2, rtol=1e-2)

    print("KERNEL_OK")
</pallas_src>

<mosaic_0001>
module attributes {stable_mosaic.version = 11 : i64} {
  func.func @_fused_kernel(%arg0: i32, %arg1: memref<8x256xf32, #tpu.memory_space<vmem>>, %arg2: memref<8x256xf32, #tpu.memory_space<vmem>>) attributes {dimension_semantics = [#tpu.dimension_semantics<parallel>], iteration_bounds = array<i64: 1>, scalar_prefetch = 0 : i64, scratch_operands = 0 : i64, tpu.core_type = #tpu.core_type<tc>, window_params = [{transform_indices = @transform_0, window_bounds = array<i64: 8, 256>}, {transform_indices = @transform_1, window_bounds = array<i64: 8, 256>}]} {
    %c0 = arith.constant 0 : index
    %c0_0 = arith.constant 0 : index
    %0 = vector.load %arg1[%c0, %c0_0] : memref<8x256xf32, #tpu.memory_space<vmem>>, vector<8x256xf32>
    %cst = arith.constant 1.000000e-01 : f32
    %1 = vector.broadcast %cst : f32 to vector<8x256xf32>
    %2 = arith.mulf %1, %0 : vector<8x256xf32>
    %cst_1 = arith.constant 8.000000e-01 : f32
    %3 = vector.broadcast %cst_1 : f32 to vector<8x256xf32>
    %4 = arith.mulf %3, %2 : vector<8x256xf32>
    %5 = arith.addf %0, %4 : vector<8x256xf32>
    %c0_2 = arith.constant 0 : index
    %c0_3 = arith.constant 0 : index
    %6 = vector.load %arg2[%c0_2, %c0_3] : memref<8x256xf32, #tpu.memory_space<vmem>>, vector<8x256xf32>
    tpu.vector_store %arg2[%c0_2, %c0_3], %5 {strides = array<i32>} : memref<8x256xf32, #tpu.memory_space<vmem>>, vector<8x256xf32>,
    return
  }
  func.func @transform_0(%arg0: i32) -> (i32, i32) {
    %c0_i32 = arith.constant 0 : i32
    %c0_i32_0 = arith.constant 0 : i32
    return %arg0, %c0_i32 : i32, i32
  }
  func.func @transform_1(%arg0: i32) -> (i32, i32) {
    %c0_i32 = arith.constant 0 : i32
    %c0_i32_0 = arith.constant 0 : i32
    return %arg0, %c0_i32 : i32, i32
  }
}

</mosaic_0001>

<llo_original>
// kernel: tpu_custom_call.1
$region0: #{tpu_custom_call.1}
  #allocation0 [shape = 'u32[]', space=smem, size = 0x4, offset = 0x4, fixed_abs, tag = 'smem constant byte address 0x4 - core index']
  #allocation1 [shape = 'u32[144,128]{1,0:T(1,128)}', space=vmem, size = 0x12000, scoped, tag = 'internal scratch']
  %s0 = inlined_call_operand.hbm [shape: f32[8,256], index: 0, kind: input, shape index: {}]
  %s1 = inlined_call_operand.hbm [shape: f32[8,256], index: 1, kind: output, shape index: {}]
  %s2 = sld [smem:[#allocation0]]
  $region18: #{tpu_custom_call.1} parent=0
    _
  %s4 = ssub.s32 1, %s2
  %s5 = scalar_select 0, %s4, %s2
  $region1: #{tpu_custom_call.1} parent=0
    #allocation2 [shape = 'u8[8192]{0}', space=vmem, size = 0x2000, scoped, tag = 'input window, operand 0, single buffered']
    #allocation3 [shape = 's32[1]{0}', space=sflag, size = 0x4, scoped, tag = 'scoped memory for tpu_custom_call.1']
    #allocation4 [shape = 's32[1]{0}', space=sflag, size = 0x4, scoped, tag = 'scoped memory for tpu_custom_call.1']
    #allocation5 [shape = 'u8[8192]{0}', space=vmem, size = 0x2000, scoped, tag = 'output window, operand 0, single buffered']
    %6 = vsyncpa [#allocation3], 0
    %7 = vsyncpa [#allocation4], 0
    // Predicated region
    $region2: #{tpu_custom_call.1} parent=1 // pred_check
      _
    $region3: #{tpu_custom_call.1} parent=1 // pred_check_branch
      %9 = sbr.rel (0) target = $region5
    $region4: #{tpu_custom_call.1} parent=1 // pred_region
      %s11 = ssub.s32 256, 256
      %12 = vsyncadd [#allocation3], %s11
      %s14 = sshll.u32 [#allocation2], 4
      %s15 = int_to_ptr.vmem [resolvable:$true] %s14
      %17 = dma.hbm_to_vmem [thread:$0]  %s0, 256, %s15, [#allocation3]
    $region5: #{tpu_custom_call.1} parent=1 // pred_fallthru
      _
    // Predicated region
    $region6: #{tpu_custom_call.1} parent=1 // pred_check
      _
    $region7: #{tpu_custom_call.1} parent=1 // pred_check_branch
      %19 = sbr.rel (0) target = $region9
    $region8: #{tpu_custom_call.1} parent=1 // pred_region
      %20 = dma.done [#allocation3], 256
    $region9: #{tpu_custom_call.1} parent=1 // pred_fallthru
      _
    %v21 = vld [vmem:[#allocation2] sm:$0xff]
    %v22 = vld [vmem:[#allocation2 + $0x8] sm:$0xff]
    %v23 = vmul.f32 %v21, 0.1
    %v24 = vmul.f32 %v22, 0.1
    %v25 = vmul.f32 %v23, 0.8
    %v26 = vmul.f32 %v24, 0.8
    %v27 = vadd.f32 %v21, %v25
    %v28 = vadd.f32 %v22, %v26
    %29 = vst [vmem:[#allocation5] sm:$0xff] %v27
    %30 = vst [vmem:[#allocation5 + $0x8] sm:$0xff] %v28
    // Predicated region
    $region10: #{tpu_custom_call.1} parent=1 // pred_check
      _
    $region11: #{tpu_custom_call.1} parent=1 // pred_check_branch
      %32 = sbr.rel (0) target = $region13
    $region12: #{tpu_custom_call.1} parent=1 // pred_region
      %s34 = ssub.s32 256, 256
      %35 = vsyncadd [#allocation4], %s34
      %s37 = sshll.u32 [#allocation5], 4
      %s38 = int_to_ptr.vmem [resolvable:$true] %s37
      %40 = dma.vmem_to_hbm [thread:$0]  %s38, 256, %s1, [#allocation4]
    $region13: #{tpu_custom_call.1} parent=1 // pred_fallthru
      _
    // Predicated region
    $region14: #{tpu_custom_call.1} parent=1 // pred_check
      _
    $region15: #{tpu_custom_call.1} parent=1 // pred_check_branch
      %42 = sbr.rel (0) target = $region17
    $region16: #{tpu_custom_call.1} parent=1 // pred_region
      %43 = dma.done [#allocation4], 256
    $region17: #{tpu_custom_call.1} parent=1 // pred_fallthru
      _
    %44 = vsyncpa [#allocation3], 1
    %45 = vsyncpa [#allocation4], 1

</llo_original>
